<compile_context>
chip_gen: v5e
topology: v5e:2x2
jax: 0.10.0
libtpu: 0.0.40
codegen_flags: <defaults>
</compile_context>

<pallas_src>
import jax
import jax.numpy as jnp
from jax.experimental import pallas as pl
from jax.experimental.pallas import tpu as pltpu

_TARGET_BLOCK_BYTES = 4 * 1024 * 1024   # per-buffer tile size
_VMEM_LIMIT_BYTES = 48 * 1024 * 1024    # covers in+out double buffering on all gens


def _hard_cutoff_kernel(cutoff_ref, x_ref, o_ref):
    x = x_ref[...]
    # Compare in the input dtype (matches torch's tensor-vs-python-scalar
    # promotion; identity for f32, keeps bf16 vregs packed on v6e/v7x).
    c = cutoff_ref[0].astype(x.dtype)
    o_ref[...] = jnp.where(jnp.abs(x) > c, x, jnp.zeros_like(x))


def _round_up(n, m):
    return (n + m - 1) // m * m


def _hard_cutoff_impl(x, cutoff=0.0):
    x = jnp.asarray(x)
    if x.size == 0 or x.ndim == 0:
        c = jnp.asarray(cutoff, dtype=x.dtype)
        return jnp.where(jnp.abs(x) > c, x, jnp.zeros_like(x))

    orig_shape = x.shape
    dtype = x.dtype
    n = x.size
    itemsize = jnp.dtype(dtype).itemsize
    packing = max(1, 4 // itemsize)       # f32:1, bf16:2, int8/fp8:4
    sublane = 8 * packing

    # --- pick a lane-dense 2D view with NO pad/slice extra HBM passes -------
    lane = None
    for cand in (1024, 512, 256, 128):
        if n % cand == 0:
            lane = cand
            break
    if lane is None:
        # Total not divisible by 128: use the natural trailing dim as a
        # full-extent lane block (masked edge stores, still one HBM pass).
        lane = orig_shape[-1]
    rows = n // lane

    # Safety valve for pathological trailing dims (huge and not 128-divisible):
    # the smallest legal tile would not fit VMEM -> let XLA handle it.
    if min(rows, sublane) * lane * itemsize > 16 * 1024 * 1024:
        c = jnp.asarray(cutoff, dtype=dtype)
        return jnp.where(jnp.abs(x) > c, x, jnp.zeros_like(x))

    x2 = x.reshape(rows, lane)

    # --- block-row sizing ----------------------------------------------------
    row_bytes = lane * itemsize
    br = max(sublane, (_TARGET_BLOCK_BYTES // row_bytes) // sublane * sublane)
    if rows <= br:
        if rows >= 2 * sublane:
            # Keep >= 2 grid steps so ("parallel",) can shard across the two
            # TensorCores on v7x instead of serializing onto one.
            br = _round_up(pl.cdiv(rows, 2), sublane)
        else:
            br = rows                      # full-extent block (always legal)
    grid = (pl.cdiv(rows, br),)

    cutoff_arr = jnp.asarray(cutoff, dtype=jnp.float32).reshape((1,))

    out2 = pl.pallas_call(
        _hard_cutoff_kernel,
        out_shape=jax.ShapeDtypeStruct((rows, lane), dtype),
        grid_spec=pltpu.PrefetchScalarGridSpec(
            num_scalar_prefetch=1,         # cutoff -> SMEM before the grid runs
            grid=grid,
            in_specs=[pl.BlockSpec((br, lane), lambda i, c: (i, 0))],
            out_specs=pl.BlockSpec((br, lane), lambda i, c: (i, 0)),
        ),
        compiler_params=pltpu.CompilerParams(
            dimension_semantics=("parallel",),
            vmem_limit_bytes=_VMEM_LIMIT_BYTES,
        ),
    )(cutoff_arr, x2)

    return out2.reshape(orig_shape)


# jit the whole wrapper: reshapes/dispatch fold away; cutoff is a traced
# scalar, so no recompilation per cutoff value (only per shape/dtype).
hard_cutoff = jax.jit(_hard_cutoff_impl)


if __name__ == "__main__":
    key = jax.random.PRNGKey(0)

    # Small NCHW-style activation tensor consistent with the module's usage.
    x = jax.random.normal(key, (2, 4, 16, 16), dtype=jnp.float32)
    cutoff = 0.5
    out = jax.block_until_ready(hard_cutoff(x, cutoff))
    ref = jnp.where(jnp.abs(x) > cutoff, x, jnp.zeros_like(x))
    assert out.shape == x.shape and out.dtype == x.dtype
    assert bool(jnp.array_equal(out, ref))

    # Non-128-divisible total -> full-extent lane-block path (no pad/slice).
    x2 = jax.random.normal(jax.random.PRNGKey(1), (3, 5, 100), dtype=jnp.float32)
    out2 = jax.block_until_ready(hard_cutoff(x2, 0.1))
    ref2 = jnp.where(jnp.abs(x2) > 0.1, x2, jnp.zeros_like(x2))
    assert bool(jnp.array_equal(out2, ref2))

    # Modest 2D activation -> exercises the multi-block ("parallel") grid path.
    x3 = jax.random.normal(jax.random.PRNGKey(2), (64, 2048), dtype=jnp.float32)
    out3 = jax.block_until_ready(hard_cutoff(x3, 0.25))
    ref3 = jnp.where(jnp.abs(x3) > 0.25, x3, jnp.zeros_like(x3))
    assert bool(jnp.array_equal(out3, ref3))

    print("KERNEL_OK")
</pallas_src>

<mosaic_0001>
module attributes {stable_mosaic.version = 11 : i64} {
  func.func @_hard_cutoff_kernel(%arg0: i32, %arg1: memref<1xf32, #tpu.memory_space<smem>>, %arg2: memref<2x1024xf32, #tpu.memory_space<vmem>>, %arg3: memref<2x1024xf32, #tpu.memory_space<vmem>>) attributes {dimension_semantics = [#tpu.dimension_semantics<parallel>], iteration_bounds = array<i64: 1>, scalar_prefetch = 1 : i64, scratch_operands = 0 : i64, tpu.core_type = #tpu.core_type<tc>, window_params = [{transform_indices = @transform_0, window_bounds = array<i64: 2, 1024>}, {transform_indices = @transform_1, window_bounds = array<i64: 2, 1024>}]} {
    %c0 = arith.constant 0 : index
    %c0_0 = arith.constant 0 : index
    %0 = vector.load %arg2[%c0, %c0_0] : memref<2x1024xf32, #tpu.memory_space<vmem>>, vector<2x1024xf32>
    %c0_1 = arith.constant 0 : index
    %1 = memref.load %arg1[%c0_1] : memref<1xf32, #tpu.memory_space<smem>>
    %2 = math.absf %0 : vector<2x1024xf32>
    %3 = vector.broadcast %1 : f32 to vector<2x1024xf32>
    %4 = arith.cmpf ogt, %2, %3 : vector<2x1024xf32>
    %cst = arith.constant 0.000000e+00 : f32
    %5 = vector.broadcast %cst : f32 to vector<2x1024xf32>
    %6 = arith.select %4, %0, %5 : vector<2x1024xi1>, vector<2x1024xf32>
    %c0_2 = arith.constant 0 : index
    %c0_3 = arith.constant 0 : index
    %7 = vector.load %arg3[%c0_2, %c0_3] : memref<2x1024xf32, #tpu.memory_space<vmem>>, vector<2x1024xf32>
    tpu.vector_store %arg3[%c0_2, %c0_3], %6 {strides = array<i32>} : memref<2x1024xf32, #tpu.memory_space<vmem>>, vector<2x1024xf32>,
    return
  }
  func.func @transform_0(%arg0: i32, %arg1: memref<1xf32, #tpu.memory_space<smem>>) -> (i32, i32) {
    %c0_i32 = arith.constant 0 : i32
    %c0_i32_0 = arith.constant 0 : i32
    return %arg0, %c0_i32 : i32, i32
  }
  func.func @transform_1(%arg0: i32, %arg1: memref<1xf32, #tpu.memory_space<smem>>) -> (i32, i32) {
    %c0_i32 = arith.constant 0 : i32
    %c0_i32_0 = arith.constant 0 : i32
    return %arg0, %c0_i32 : i32, i32
  }
}

</mosaic_0001>

<llo_original>
// kernel: _hard_cutoff_impl.1
$region0: #{_hard_cutoff_impl.1}
  #allocation0 [shape = 'u32[]', space=smem, size = 0x4, offset = 0x4, fixed_abs, tag = 'smem constant byte address 0x4 - core index']
  #allocation1 [shape = 'u32[72,128]{1,0:T(1,128)}', space=vmem, size = 0x9000, scoped, tag = 'internal scratch']
  #allocation2 [shape = 's32[1]{0}', space=sflag, size = 0x4, scoped, tag = 'scoped memory for _hard_cutoff_impl.1']
  #allocation3 [shape = 'f32[1]{0:T(128)S(6)}', space=smem, size = 0x200, scoped, tag = 'prefetched SMEM operand 0']
  %s0 = inlined_call_operand.<no memory space> [shape: f32[1], index: 0, kind: input, shape index: {}]
  %s1 = inlined_call_operand.vmem [shape: f32[2,1024], index: 1, kind: input, shape index: {}]
  %s2 = inlined_call_operand.vmem [shape: f32[2,1024], index: 2, kind: output, shape index: {}]
  %s3 = sld [smem:[#allocation0]]
  $region14: #{_hard_cutoff_impl.1} parent=0
    _
  %s5 = ssub.s32 1, %s3
  %s6 = scalar_select 0, %s5, %s3
  %7 = sst [smem:[#allocation3]] %s0
  // Predicated region
  $region2: #{_hard_cutoff_impl.1} parent=0 // pred_check
    _
  $region3: #{_hard_cutoff_impl.1} parent=0 // pred_check_branch
    %9 = sbr.rel (0) target = $region5
  $region4: #{_hard_cutoff_impl.1} parent=0 // pred_region
    _
  $region5: #{_hard_cutoff_impl.1} parent=0 // pred_fallthru
    _
  %v10 = vld [vmem:[%s1] sm:$0xff]
  %v11 = vld [vmem:[%s1 + $0x8] sm:$0xff]
  %s12 = sld [smem:[#allocation3]]
  %v13 = vand.u32 2147483647, %v10
  %v14 = vand.u32 2147483647, %v11
  %v15 = vstv %s12
  %vm16 = vcmp.gt.f32.partialorder %v13, %v15
  %vm17 = vcmp.gt.f32.partialorder %v14, %v15
  %v18 = vsel %vm16, %v10, 0.0
  %v19 = vsel %vm17, %v11, 0.0
  %20 = vst [vmem:[%s2] sm:$0xff] %v18
  %21 = vst [vmem:[%s2 + $0x8] sm:$0xff] %v19
  // Predicated region
  $region6: #{_hard_cutoff_impl.1} parent=0 // pred_check
    _
  $region7: #{_hard_cutoff_impl.1} parent=0 // pred_check_branch
    %23 = sbr.rel (0) target = $region9
  $region8: #{_hard_cutoff_impl.1} parent=0 // pred_region
    _
  $region9: #{_hard_cutoff_impl.1} parent=0 // pred_fallthru
    _
  // Predicated region
  $region10: #{_hard_cutoff_impl.1} parent=0 // pred_check
    _
  $region11: #{_hard_cutoff_impl.1} parent=0 // pred_check_branch
    %25 = sbr.rel (0) target = $region13
  $region12: #{_hard_cutoff_impl.1} parent=0 // pred_region
    _
  $region13: #{_hard_cutoff_impl.1} parent=0 // pred_fallthru
    _

</llo_original>
